<compile_context>
chip_gen: v5e
topology: v5e:2x2
jax: 0.10.0
libtpu: 0.0.40
codegen_flags: <defaults>
</compile_context>

<pallas_src>
import functools

import jax
import jax.numpy as jnp
from jax.experimental import pallas as pl
from jax.experimental.pallas import tpu as pltpu


def _round_up(a, m):
    return ((a + m - 1) // m) * m


def featurenet_kernel(x_ref, t_ref,
                      wx_ref, wt_ref, ws2_ref,
                      w2_ref, w3_ref, w4_ref, wf_ref,
                      bias_ref, out_ref, *, d1):
    f32 = jnp.float32
    bf16 = jnp.bfloat16

    x = x_ref[...].astype(bf16)      # (TN, nx)
    t = t_ref[...].astype(bf16)      # (TN, nt)
    b = bias_ref[...]                # (6, D2) f32, resident in VMEM

    # Stage 1: fused fc1 / fc1_var -> lane-contiguous [hx | ht0 | 0...] slab.
    h = (jnp.dot(x, wx_ref[...], preferred_element_type=f32)
         + jnp.dot(t, wt_ref[...], preferred_element_type=f32)
         + b[0:1])
    h = jnp.maximum(h, 0.0)

    # Stage 2: block-diag(I, fc2_var). Identity half is exact: ReLU(hx) == hx.
    h = jnp.dot(h.astype(bf16), ws2_ref[...], preferred_element_type=f32) + b[1:2]
    h = jnp.maximum(h, 0.0)

    # fc2 on the contiguous [hx | ht] slab (concat folded away entirely).
    h = jnp.dot(h.astype(bf16), w2_ref[...], preferred_element_type=f32) + b[2:3]
    h = jnp.maximum(h, 0.0)

    # fc3 + ReLU
    h = jnp.dot(h.astype(bf16), w3_ref[...], preferred_element_type=f32) + b[3:4]
    h = jnp.maximum(h, 0.0)

    # fc4 + ReLU
    h = jnp.dot(h.astype(bf16), w4_ref[...], preferred_element_type=f32) + b[4:5]
    h = jnp.maximum(h, 0.0)

    # fc_final (no activation)
    out = (jnp.dot(h.astype(bf16), wf_ref[...], preferred_element_type=f32)
           + b[5:6, :d1])
    out_ref[...] = out.astype(out_ref.dtype)


@functools.partial(jax.jit, static_argnames=("nh", "tn_max"))
def featurenet_forward(x, t, kparams, *, nh, tn_max=512):
    """Mirrors FeatureNet.forward. x: (N, nx) or (T, B, nx); t likewise with nt."""
    wx, wt, ws2, w2p, w3p, w4p, wfp, biases = kparams

    re = x.ndim == 3
    if re:
        T, B, _ = x.shape
        x2 = x.reshape(T * B, x.shape[-1])
        t2 = t.reshape(T * B, t.shape[-1])
    else:
        x2, t2 = x, t

    N, nx = x2.shape
    nt = t2.shape[-1]
    d2 = wx.shape[1]        # lane-dense hidden width  (round_up(2*nh, 128))
    d1 = wfp.shape[1]       # lane-dense output width  (round_up(nh, 128))

    # Row tile: big for MXU M-occupancy / grid-step amortization, but capped so
    # the grid has >= 2 steps when N is small (v7x megacore sharding). No
    # full-array padding: cdiv grid + partial last block (rows are independent,
    # OOB rows are dropped on writeback).
    tn = max(16, min(tn_max, _round_up(pl.cdiv(N, 2), 16)))
    grid = (pl.cdiv(N, tn),)

    row = lambda i: (i, 0)
    full = lambda i: (0, 0)

    kernel = functools.partial(featurenet_kernel, d1=d1)
    out = pl.pallas_call(
        kernel,
        out_shape=jax.ShapeDtypeStruct((N, d1), jnp.float32),
        grid_spec=pltpu.PrefetchScalarGridSpec(
            num_scalar_prefetch=0,
            grid=grid,
            in_specs=[
                pl.BlockSpec((tn, nx), row),    # x tile (f32, cast in-kernel)
                pl.BlockSpec((tn, nt), row),    # t tile
                pl.BlockSpec((nx, d2), full),   # stage-1 weight, x half
                pl.BlockSpec((nt, d2), full),   # stage-1 weight, t half
                pl.BlockSpec((d2, d2), full),   # stage-2 blockdiag(I, fc2_var)
                pl.BlockSpec((d2, d2), full),   # fc2 (padded)
                pl.BlockSpec((d2, d2), full),   # fc3 (padded)
                pl.BlockSpec((d2, d2), full),   # fc4 (padded)
                pl.BlockSpec((d2, d1), full),   # fc_final (padded)
                pl.BlockSpec((6, d2), full),    # packed biases
            ],
            out_specs=pl.BlockSpec((tn, d1), row),
        ),
        compiler_params=pltpu.CompilerParams(
            dimension_semantics=("parallel",)),
    )(x2, t2, wx, wt, ws2, w2p, w3p, w4p, wfp, biases)

    out = out[:, :nh]
    if re:
        out = out.reshape(T, B, nh)
    return out


def init_raw_params(key, nx, nh, nt):
    """nn.Linear-style init; weights stored transposed (in, out), all f32."""
    ks = jax.random.split(key, 14)

    def uni(k, shape, fan_in):
        bound = 1.0 / (fan_in ** 0.5)
        return jax.random.uniform(k, shape, jnp.float32, -bound, bound)

    nh2 = 2 * nh
    w1 = uni(ks[0], (nx, nh), nx);      b1 = uni(ks[1], (1, nh), nx)
    w1v = uni(ks[2], (nt, nh), nt);     b1v = uni(ks[3], (1, nh), nt)
    w2v = uni(ks[4], (nh, nh), nh);     b2v = uni(ks[5], (1, nh), nh)
    w2 = uni(ks[6], (nh2, nh2), nh2);   b2 = uni(ks[7], (1, nh2), nh2)
    w3 = uni(ks[8], (nh2, nh2), nh2);   b3 = uni(ks[9], (1, nh2), nh2)
    w4 = uni(ks[10], (nh2, nh2), nh2);  b4 = uni(ks[11], (1, nh2), nh2)
    wf = uni(ks[12], (nh2, nh), nh2);   bf = uni(ks[13], (1, nh), nh2)
    return (w1, b1, w1v, b1v, w2v, b2v, w2, b2, w3, b3, w4, b4, wf, bf)


def prepare_kernel_params(raw, nx, nh, nt):
    """Build lane-padded, block-diagonal-fused, bf16 weights + packed f32 biases."""
    (w1, b1, w1v, b1v, w2v, b2v, w2, b2, w3, b3, w4, b4, wf, bf) = raw
    nh2 = 2 * nh
    d2 = _round_up(nh2, 128)   # hidden slab width
    d1 = _round_up(nh, 128)    # output width

    def zpad(w, rows, cols, r0=0, c0=0):
        z = jnp.zeros((rows, cols), jnp.float32)
        return z.at[r0:r0 + w.shape[0], c0:c0 + w.shape[1]].set(w)

    # Stage 1: block-diagonal fc1 / fc1_var (x -> cols [0,nh), t -> cols [nh,2nh)).
    wx = zpad(w1, nx, d2, 0, 0)
    wt = zpad(w1v, nt, d2, 0, nh)
    # Stage 2: identity on the x half, fc2_var on the t half.
    ws2 = jnp.zeros((d2, d2), jnp.float32)
    ws2 = ws2.at[:nh, :nh].set(jnp.eye(nh, dtype=jnp.float32))
    ws2 = ws2.at[nh:nh2, nh:nh2].set(w2v)
    # Remaining layers, zero-padded to lane-dense shapes.
    w2p = zpad(w2, d2, d2)
    w3p = zpad(w3, d2, d2)
    w4p = zpad(w4, d2, d2)
    wfp = zpad(wf, d2, d1)

    # Pack all biases into one (6, d2) f32 array.
    biases = jnp.zeros((6, d2), jnp.float32)
    biases = biases.at[0, :nh].set(b1[0]).at[0, nh:nh2].set(b1v[0])
    biases = biases.at[1, nh:nh2].set(b2v[0])
    biases = biases.at[2, :nh2].set(b2[0])
    biases = biases.at[3, :nh2].set(b3[0])
    biases = biases.at[4, :nh2].set(b4[0])
    biases = biases.at[5, :nh].set(bf[0])

    cast = lambda a: a.astype(jnp.bfloat16)
    return (cast(wx), cast(wt), cast(ws2), cast(w2p), cast(w3p), cast(w4p),
            cast(wfp), biases)


def reference_forward(x, t, raw):
    """Pure-JAX reference following the original module structure with the
    kernel's numerics (bf16 matmul operands, f32 accumulation, f32 epilogue)."""
    (w1, b1, w1v, b1v, w2v, b2v, w2, b2, w3, b3, w4, b4, wf, bf) = raw
    re = x.ndim == 3
    if re:
        T, B, _ = x.shape
        x = x.reshape(T * B, -1)
        t = t.reshape(T * B, -1)

    bf16 = jnp.bfloat16
    d = lambda a, w: jnp.dot(a.astype(bf16), w.astype(bf16),
                             preferred_element_type=jnp.float32)
    hx = jnp.maximum(d(x, w1) + b1, 0.0)
    ht = jnp.maximum(d(t, w1v) + b1v, 0.0)
    ht = jnp.maximum(d(ht, w2v) + b2v, 0.0)
    h = jnp.concatenate([hx, ht], axis=1)
    h = jnp.maximum(d(h, w2) + b2, 0.0)
    h = jnp.maximum(d(h, w3) + b3, 0.0)
    h = jnp.maximum(d(h, w4) + b4, 0.0)
    out = d(h, wf) + bf
    if re:
        out = out.reshape(T, B, -1)
    return out


if __name__ == "__main__":
    key = jax.random.PRNGKey(0)
    kp, kx, kt = jax.random.split(key, 3)

    # Small shapes: nx = nh = 32, nt = 16, seq T = 7, batch B = 3
    # (T*B = 21 exercises the partial-last-tile path and a 2-step grid).
    NX, NH, NT = 32, 32, 16
    T, B = 7, 3

    raw = init_raw_params(kp, NX, NH, NT)
    kparams = prepare_kernel_params(raw, NX, NH, NT)

    x = jax.random.normal(kx, (T, B, NX), jnp.float32)
    t = jax.random.normal(kt, (T, B, NT), jnp.float32)

    out = featurenet_forward(x, t, kparams, nh=NH)
    jax.block_until_ready(out)

    ref = reference_forward(x, t, raw)
    assert out.shape == (T, B, NH)
    err = float(jnp.max(jnp.abs(out - ref)))
    assert jnp.allclose(out, ref, atol=2e-3, rtol=2e-3), f"max abs err {err}"

    print("KERNEL_OK")
</pallas_src>

<mosaic_0001>
module attributes {stable_mosaic.version = 11 : i64} {
  func.func @featurenet_kernel(%arg0: i32, %arg1: memref<16x32xf32, #tpu.memory_space<vmem>>, %arg2: memref<16x16xf32, #tpu.memory_space<vmem>>, %arg3: memref<32x128xbf16, #tpu.memory_space<vmem>>, %arg4: memref<16x128xbf16, #tpu.memory_space<vmem>>, %arg5: memref<128x128xbf16, #tpu.memory_space<vmem>>, %arg6: memref<128x128xbf16, #tpu.memory_space<vmem>>, %arg7: memref<128x128xbf16, #tpu.memory_space<vmem>>, %arg8: memref<128x128xbf16, #tpu.memory_space<vmem>>, %arg9: memref<128x128xbf16, #tpu.memory_space<vmem>>, %arg10: memref<6x128xf32, #tpu.memory_space<vmem>>, %arg11: memref<16x128xf32, #tpu.memory_space<vmem>>) attributes {dimension_semantics = [#tpu.dimension_semantics<parallel>], iteration_bounds = array<i64: 2>, scalar_prefetch = 0 : i64, scratch_operands = 0 : i64, tpu.core_type = #tpu.core_type<tc>, window_params = [{transform_indices = @transform_0, window_bounds = array<i64: 16, 32>}, {transform_indices = @transform_1, window_bounds = array<i64: 16, 16>}, {pipeline_mode = #tpu.pipeline_mode<synchronous>, transform_indices = @transform_2, window_bounds = array<i64: 32, 128>}, {pipeline_mode = #tpu.pipeline_mode<synchronous>, transform_indices = @transform_3, window_bounds = array<i64: 16, 128>}, {pipeline_mode = #tpu.pipeline_mode<synchronous>, transform_indices = @transform_4, window_bounds = array<i64: 128, 128>}, {pipeline_mode = #tpu.pipeline_mode<synchronous>, transform_indices = @transform_5, window_bounds = array<i64: 128, 128>}, {pipeline_mode = #tpu.pipeline_mode<synchronous>, transform_indices = @transform_6, window_bounds = array<i64: 128, 128>}, {pipeline_mode = #tpu.pipeline_mode<synchronous>, transform_indices = @transform_7, window_bounds = array<i64: 128, 128>}, {pipeline_mode = #tpu.pipeline_mode<synchronous>, transform_indices = @transform_8, window_bounds = array<i64: 128, 128>}, {pipeline_mode = #tpu.pipeline_mode<synchronous>, transform_indices = @transform_9, window_bounds = array<i64: 6, 128>}, {transform_indices = @transform_10, window_bounds = array<i64: 16, 128>}]} {
    %c0 = arith.constant 0 : index
    %c0_0 = arith.constant 0 : index
    %0 = vector.load %arg1[%c0, %c0_0] : memref<16x32xf32, #tpu.memory_space<vmem>>, vector<16x32xf32>
    %1 = arith.truncf %0 : vector<16x32xf32> to vector<16x32xbf16>
    %c0_1 = arith.constant 0 : index
    %c0_2 = arith.constant 0 : index
    %2 = vector.load %arg2[%c0_1, %c0_2] : memref<16x16xf32, #tpu.memory_space<vmem>>, vector<16x16xf32>
    %3 = arith.truncf %2 : vector<16x16xf32> to vector<16x16xbf16>
    %c0_3 = arith.constant 0 : index
    %c0_4 = arith.constant 0 : index
    %4 = vector.load %arg10[%c0_3, %c0_4] : memref<6x128xf32, #tpu.memory_space<vmem>>, vector<6x128xf32>
    %c0_5 = arith.constant 0 : index
    %c0_6 = arith.constant 0 : index
    %5 = vector.load %arg3[%c0_5, %c0_6] : memref<32x128xbf16, #tpu.memory_space<vmem>>, vector<32x128xbf16>
    %cst = arith.constant dense<0.000000e+00> : vector<16x128xf32>
    %6 = tpu.matmul %1, %5, %cst {dimension_numbers = #tpu.dot_dimension_numbers<[1], [0], [0], [1], [0, 0, 1, 1], [], []>} : vector<16x32xbf16>, vector<32x128xbf16>, vector<16x128xf32> -> vector<16x128xf32>
    %c0_7 = arith.constant 0 : index
    %c0_8 = arith.constant 0 : index
    %7 = vector.load %arg4[%c0_7, %c0_8] : memref<16x128xbf16, #tpu.memory_space<vmem>>, vector<16x128xbf16>
    %cst_9 = arith.constant dense<0.000000e+00> : vector<16x128xf32>
    %8 = tpu.matmul %3, %7, %cst_9 {dimension_numbers = #tpu.dot_dimension_numbers<[1], [0], [0], [1], [0, 0, 1, 1], [], []>} : vector<16x16xbf16>, vector<16x128xbf16>, vector<16x128xf32> -> vector<16x128xf32>
    %9 = arith.addf %6, %8 : vector<16x128xf32>
    %10 = vector.extract_strided_slice %4 {offsets = [0, 0], sizes = [1, 128], strides = [1, 1]} : vector<6x128xf32> to vector<1x128xf32>
    %11 = vector.broadcast %10 : vector<1x128xf32> to vector<16x128xf32>
    %12 = arith.addf %9, %11 : vector<16x128xf32>
    %cst_10 = arith.constant 0.000000e+00 : f32
    %13 = vector.broadcast %cst_10 : f32 to vector<16x128xf32>
    %14 = arith.maximumf %12, %13 : vector<16x128xf32>
    %15 = arith.truncf %14 : vector<16x128xf32> to vector<16x128xbf16>
    %c0_11 = arith.constant 0 : index
    %c0_12 = arith.constant 0 : index
    %16 = vector.load %arg5[%c0_11, %c0_12] : memref<128x128xbf16, #tpu.memory_space<vmem>>, vector<128x128xbf16>
    %cst_13 = arith.constant dense<0.000000e+00> : vector<16x128xf32>
    %17 = tpu.matmul %15, %16, %cst_13 {dimension_numbers = #tpu.dot_dimension_numbers<[1], [0], [0], [1], [0, 0, 1, 1], [], []>} : vector<16x128xbf16>, vector<128x128xbf16>, vector<16x128xf32> -> vector<16x128xf32>
    %18 = vector.extract_strided_slice %4 {offsets = [1, 0], sizes = [1, 128], strides = [1, 1]} : vector<6x128xf32> to vector<1x128xf32>
    %19 = vector.broadcast %18 : vector<1x128xf32> to vector<16x128xf32>
    %20 = arith.addf %17, %19 : vector<16x128xf32>
    %cst_14 = arith.constant 0.000000e+00 : f32
    %21 = vector.broadcast %cst_14 : f32 to vector<16x128xf32>
    %22 = arith.maximumf %20, %21 : vector<16x128xf32>
    %23 = arith.truncf %22 : vector<16x128xf32> to vector<16x128xbf16>
    %c0_15 = arith.constant 0 : index
    %c0_16 = arith.constant 0 : index
    %24 = vector.load %arg6[%c0_15, %c0_16] : memref<128x128xbf16, #tpu.memory_space<vmem>>, vector<128x128xbf16>
    %cst_17 = arith.constant dense<0.000000e+00> : vector<16x128xf32>
    %25 = tpu.matmul %23, %24, %cst_17 {dimension_numbers = #tpu.dot_dimension_numbers<[1], [0], [0], [1], [0, 0, 1, 1], [], []>} : vector<16x128xbf16>, vector<128x128xbf16>, vector<16x128xf32> -> vector<16x128xf32>
    %26 = vector.extract_strided_slice %4 {offsets = [2, 0], sizes = [1, 128], strides = [1, 1]} : vector<6x128xf32> to vector<1x128xf32>
    %27 = vector.broadcast %26 : vector<1x128xf32> to vector<16x128xf32>
    %28 = arith.addf %25, %27 : vector<16x128xf32>
    %cst_18 = arith.constant 0.000000e+00 : f32
    %29 = vector.broadcast %cst_18 : f32 to vector<16x128xf32>
    %30 = arith.maximumf %28, %29 : vector<16x128xf32>
    %31 = arith.truncf %30 : vector<16x128xf32> to vector<16x128xbf16>
    %c0_19 = arith.constant 0 : index
    %c0_20 = arith.constant 0 : index
    %32 = vector.load %arg7[%c0_19, %c0_20] : memref<128x128xbf16, #tpu.memory_space<vmem>>, vector<128x128xbf16>
    %cst_21 = arith.constant dense<0.000000e+00> : vector<16x128xf32>
    %33 = tpu.matmul %31, %32, %cst_21 {dimension_numbers = #tpu.dot_dimension_numbers<[1], [0], [0], [1], [0, 0, 1, 1], [], []>} : vector<16x128xbf16>, vector<128x128xbf16>, vector<16x128xf32> -> vector<16x128xf32>
    %34 = vector.extract_strided_slice %4 {offsets = [3, 0], sizes = [1, 128], strides = [1, 1]} : vector<6x128xf32> to vector<1x128xf32>
    %35 = vector.broadcast %34 : vector<1x128xf32> to vector<16x128xf32>
    %36 = arith.addf %33, %35 : vector<16x128xf32>
    %cst_22 = arith.constant 0.000000e+00 : f32
    %37 = vector.broadcast %cst_22 : f32 to vector<16x128xf32>
    %38 = arith.maximumf %36, %37 : vector<16x128xf32>
    %39 = arith.truncf %38 : vector<16x128xf32> to vector<16x128xbf16>
    %c0_23 = arith.constant 0 : index
    %c0_24 = arith.constant 0 : index
    %40 = vector.load %arg8[%c0_23, %c0_24] : memref<128x128xbf16, #tpu.memory_space<vmem>>, vector<128x128xbf16>
    %cst_25 = arith.constant dense<0.000000e+00> : vector<16x128xf32>
    %41 = tpu.matmul %39, %40, %cst_25 {dimension_numbers = #tpu.dot_dimension_numbers<[1], [0], [0], [1], [0, 0, 1, 1], [], []>} : vector<16x128xbf16>, vector<128x128xbf16>, vector<16x128xf32> -> vector<16x128xf32>
    %42 = vector.extract_strided_slice %4 {offsets = [4, 0], sizes = [1, 128], strides = [1, 1]} : vector<6x128xf32> to vector<1x128xf32>
    %43 = vector.broadcast %42 : vector<1x128xf32> to vector<16x128xf32>
    %44 = arith.addf %41, %43 : vector<16x128xf32>
    %cst_26 = arith.constant 0.000000e+00 : f32
    %45 = vector.broadcast %cst_26 : f32 to vector<16x128xf32>
    %46 = arith.maximumf %44, %45 : vector<16x128xf32>
    %47 = arith.truncf %46 : vector<16x128xf32> to vector<16x128xbf16>
    %c0_27 = arith.constant 0 : index
    %c0_28 = arith.constant 0 : index
    %48 = vector.load %arg9[%c0_27, %c0_28] : memref<128x128xbf16, #tpu.memory_space<vmem>>, vector<128x128xbf16>
    %cst_29 = arith.constant dense<0.000000e+00> : vector<16x128xf32>
    %49 = tpu.matmul %47, %48, %cst_29 {dimension_numbers = #tpu.dot_dimension_numbers<[1], [0], [0], [1], [0, 0, 1, 1], [], []>} : vector<16x128xbf16>, vector<128x128xbf16>, vector<16x128xf32> -> vector<16x128xf32>
    %50 = vector.extract_strided_slice %4 {offsets = [5, 0], sizes = [1, 128], strides = [1, 1]} : vector<6x128xf32> to vector<1x128xf32>
    %51 = vector.broadcast %50 : vector<1x128xf32> to vector<16x128xf32>
    %52 = arith.addf %49, %51 : vector<16x128xf32>
    %c0_30 = arith.constant 0 : index
    %c0_31 = arith.constant 0 : index
    %53 = vector.load %arg11[%c0_30, %c0_31] : memref<16x128xf32, #tpu.memory_space<vmem>>, vector<16x128xf32>
    tpu.vector_store %arg11[%c0_30, %c0_31], %52 {strides = array<i32>} : memref<16x128xf32, #tpu.memory_space<vmem>>, vector<16x128xf32>,
    return
  }
  func.func @transform_0(%arg0: i32) -> (i32, i32) {
    %c0_i32 = arith.constant 0 : i32
    %c0_i32_0 = arith.constant 0 : i32
    return %arg0, %c0_i32 : i32, i32
  }
  func.func @transform_1(%arg0: i32) -> (i32, i32) {
    %c0_i32 = arith.constant 0 : i32
    %c0_i32_0 = arith.constant 0 : i32
    return %arg0, %c0_i32 : i32, i32
  }
  func.func @transform_2(%arg0: i32) -> (i32, i32) {
    %c0_i32 = arith.constant 0 : i32
    %c0_i32_0 = arith.constant 0 : i32
    %c0_i32_1 = arith.constant 0 : i32
    return %c0_i32, %c0_i32_0 : i32, i32
  }
  func.func @transform_3(%arg0: i32) -> (i32, i32) {
    %c0_i32 = arith.constant 0 : i32
    %c0_i32_0 = arith.constant 0 : i32
    %c0_i32_1 = arith.constant 0 : i32
    return %c0_i32, %c0_i32_0 : i32, i32
  }
  func.func @transform_4(%arg0: i32) -> (i32, i32) {
    %c0_i32 = arith.constant 0 : i32
    %c0_i32_0 = arith.constant 0 : i32
    %c0_i32_1 = arith.constant 0 : i32
    return %c0_i32, %c0_i32_0 : i32, i32
  }
  func.func @transform_5(%arg0: i32) -> (i32, i32) {
    %c0_i32 = arith.constant 0 : i32
    %c0_i32_0 = arith.constant 0 : i32
    %c0_i32_1 = arith.constant 0 : i32
    return %c0_i32, %c0_i32_0 : i32, i32
  }
  func.func @transform_6(%arg0: i32) -> (i32, i32) {
    %c0_i32 = arith.constant 0 : i32
    %c0_i32_0 = arith.constant 0 : i32
    %c0_i32_1 = arith.constant 0 : i32
    return %c0_i32, %c0_i32_0 : i32, i32
  }
  func.func @transform_7(%arg0: i32) -> (i32, i32) {
    %c0_i32 = arith.constant 0 : i32
    %c0_i32_0 = arith.constant 0 : i32
    %c0_i32_1 = arith.constant 0 : i32
    return %c0_i32, %c0_i32_0 : i32, i32
  }
  func.func @transform_8(%arg0: i32) -> (i32, i32) {
    %c0_i32 = arith.constant 0 : i32
    %c0_i32_0 = arith.constant 0 : i32
    %c0_i32_1 = arith.constant 0 : i32
    return %c0_i32, %c0_i32_0 : i32, i32
  }
  func.func @transform_9(%arg0: i32) -> (i32, i32) {
    %c0_i32 = arith.constant 0 : i32
    %c0_i32_0 = arith.constant 0 : i32
    %c0_i32_1 = arith.constant 0 : i32
    return %c0_i32, %c0_i32_0 : i32, i32
  }
  func.func @transform_10(%arg0: i32) -> (i32, i32) {
    %c0_i32 = arith.constant 0 : i32
    %c0_i32_0 = arith.constant 0 : i32
    return %arg0, %c0_i32 : i32, i32
  }
}

</mosaic_0001>

<llo_original>
// kernel: featurenet_forward.1
$region0: #{featurenet_forward.1}
  #allocation0 [shape = 'u32[]', space=smem, size = 0x4, offset = 0x4, fixed_abs, tag = 'smem constant byte address 0x4 - core index']
  #allocation1 [shape = 'u32[72,128]{1,0:T(1,128)}', space=vmem, size = 0x9000, scoped, tag = 'internal scratch']
  %s0 = inlined_call_operand.vmem [shape: f32[21,32], index: 0, kind: input, shape index: {}]
  %s1 = inlined_call_operand.vmem [shape: f32[21,16], index: 1, kind: input, shape index: {}]
  %s2 = inlined_call_operand.vmem [shape: bf16[32,128], index: 2, kind: input, shape index: {}]
  %s3 = inlined_call_operand.vmem [shape: bf16[16,128], index: 3, kind: input, shape index: {}]
  %s4 = inlined_call_operand.vmem [shape: bf16[128,128], index: 4, kind: input, shape index: {}]
  %s5 = inlined_call_operand.vmem [shape: bf16[128,128], index: 5, kind: input, shape index: {}]
  %s6 = inlined_call_operand.hbm [shape: bf16[128,128], index: 6, kind: input, shape index: {}]
  %s7 = inlined_call_operand.hbm [shape: bf16[128,128], index: 7, kind: input, shape index: {}]
  %s8 = inlined_call_operand.hbm [shape: bf16[128,128], index: 8, kind: input, shape index: {}]
  %s9 = inlined_call_operand.vmem [shape: f32[6,128], index: 9, kind: input, shape index: {}]
  %s10 = inlined_call_operand.vmem [shape: f32[21,128], index: 10, kind: output, shape index: {}]
  %s11 = sld [smem:[#allocation0]]
  $region133: #{featurenet_forward.1} parent=0
    _
  %s13 = ssub.s32 1, %s11
  %s14 = scalar_select 0, %s13, %s11
  $region1: #{featurenet_forward.1} parent=0
    #allocation2 [shape = 'u8[32768]{0}', space=vmem, size = 0x8000, scoped, tag = 'input window, operand 6, single buffered']
    #allocation3 [shape = 's32[2]{0}', space=sflag, size = 0x8, scoped, tag = 'scoped memory for featurenet_forward.1']
    #allocation4 [shape = 'u8[32768]{0}', space=vmem, size = 0x8000, scoped, tag = 'input window, operand 7, single buffered']
    #allocation5 [shape = 's32[1]{0}', space=sflag, size = 0x4, scoped, tag = 'scoped memory for featurenet_forward.1']
    #allocation6 [shape = 'u8[32768]{0}', space=vmem, size = 0x8000, scoped, tag = 'input window, operand 8, single buffered']
    #allocation7 [shape = 'u8[16384]{0}', space=vmem, size = 0x4000, scoped, tag = 'output window, operand 0']
    %15 = vsyncpa [#allocation3], 0
    %16 = vsyncpa [#allocation5], 0
    loop: start=0, step=1, limit=4
    $region2: #{featurenet_forward.1} parent=1 // loop_pre_header
      _
    $region3: #{featurenet_forward.1} parent=1 // loop_header
      %s18 = sphi 0, %s22
      %p19 = scmp.ge.s32.totalorder %s18, 4
      %s28 = sphi 0, %s30
      %s31 = sphi 0, %s28
      %s32 = sphi 0, %s31
      %s48 = sphi 0, %s32
      %s54 = sphi 0, %s56
      %s57 = sphi 0, %s54
      %s58 = sphi 0, %s57
      %s74 = sphi 0, %s58
      %s78 = sphi 0, %s78
      %s80 = sphi 0, %s78
      %s81 = sphi 0, %s80
      %s95 = sphi 0, %s81
      %s99 = sphi 0, %s99
      %s101 = sphi 0, %s99
      %s102 = sphi 0, %s101
      %s116 = sphi 0, %s102
      %s120 = sphi 0, %s120
      %s122 = sphi 0, %s120
      %s123 = sphi 0, %s122
      %s137 = sphi 0, %s123
      %s141 = sphi 0, %s141
      %s143 = sphi 0, %s141
      %s144 = sphi 0, %s143
      %s158 = sphi 0, %s144
      %s162 = sphi 0, %s162
      %s164 = sphi 0, %s162
      %s165 = sphi 0, %s164
      %s179 = sphi 0, %s165
      %s183 = sphi 0, %s183
      %s185 = sphi 0, %s183
      %s186 = sphi 0, %s185
      %s200 = sphi 0, %s186
      %s204 = sphi 0, %s204
      %s206 = sphi 0, %s204
      %s207 = sphi 0, %s206
      %s221 = sphi 0, %s207
      %s225 = sphi 0, %s225
      %s227 = sphi 0, %s225
      %s228 = sphi 0, %s227
      %s242 = sphi 0, %s228
      %s248 = sphi 0, %s250
      %s251 = sphi 0, %s248
      %s252 = sphi 0, %s251
      %s268 = sphi 0, %s252
    $region4: #{featurenet_forward.1} parent=1 // loop_header_branch
      %21 = sbr.rel (%p19) target = $region8
    $region5: #{featurenet_forward.1} parent=1 // loop_body
      %s23 = ssub.s32 %s18, 1
      %s24 = ssub.s32 %s18, 2
      %s25 = sadd.s32 %s18, 1
      %s26 = ssub.s32 %s18, %s25
      %p27 = scmp.eq.s32.totalorder %s26, 0
      %s29 = sadd.s32 %s28, 1
      %s30 = scalar_select %p27, %s28, %s29
      %p33 = pneg %p27
      %p34 = scmp.eq.s32.totalorder %s18, 1
      %p35 = por %p33, %p34
      %p36 = scmp.ne.s32.totalorder %s28, %s31
      %p37 = scmp.eq.s32.totalorder %s18, 0
      %p38 = por %p36, %p37
      %p39 = scmp.ne.s32.totalorder %s28, %s31
      %p40 = scmp.eq.s32.totalorder %s23, 1
      %p41 = por %p39, %p40
      %p42 = scmp.ne.s32.totalorder %s31, %s32
      %p43 = scmp.eq.s32.totalorder %s23, 0
      %p44 = por %p42, %p43
      %p45 = scmp.ne.s32.totalorder %s31, %s32
      %p46 = scmp.eq.s32.totalorder %s24, 1
      %p47 = por %p45, %p46
      %p49 = scmp.ne.s32.totalorder %s32, %s48
      %p50 = scmp.eq.s32.totalorder %s24, 0
      %p51 = por %p49, %p50
      %s52 = ssub.s32 %s18, %s25
      %p53 = scmp.eq.s32.totalorder %s52, 0
      %s55 = sadd.s32 %s54, 1
      %s56 = scalar_select %p53, %s54, %s55
      %p59 = pneg %p53
      %p60 = scmp.eq.s32.totalorder %s18, 1
      %p61 = por %p59, %p60
      %p62 = scmp.ne.s32.totalorder %s54, %s57
      %p63 = scmp.eq.s32.totalorder %s18, 0
      %p64 = por %p62, %p63
      %p65 = scmp.ne.s32.totalorder %s54, %s57
      %p66 = scmp.eq.s32.totalorder %s23, 1
      %p67 = por %p65, %p66
      %p68 = scmp.ne.s32.totalorder %s57, %s58
      %p69 = scmp.eq.s32.totalorder %s23, 0
      %p70 = por %p68, %p69
      %p71 = scmp.ne.s32.totalorder %s57, %s58
      %p72 = scmp.eq.s32.totalorder %s24, 1
      %p73 = por %p71, %p72
      %p75 = scmp.ne.s32.totalorder %s58, %s74
      %p76 = scmp.eq.s32.totalorder %s24, 0
      %p77 = por %p75, %p76
      %s79 = sadd.s32 %s78, 1
      %p82 = scmp.eq.s32.totalorder %s18, 1
      %p83 = scmp.ne.s32.totalorder %s78, %s80
      %p84 = scmp.eq.s32.totalorder %s18, 0
      %p85 = por %p83, %p84
      %p86 = scmp.ne.s32.totalorder %s78, %s80
      %p87 = scmp.eq.s32.totalorder %s23, 1
      %p88 = por %p86, %p87
      %p89 = scmp.ne.s32.totalorder %s80, %s81
      %p90 = scmp.eq.s32.totalorder %s23, 0
      %p91 = por %p89, %p90
      %p92 = scmp.ne.s32.totalorder %s80, %s81
      %p93 = scmp.eq.s32.totalorder %s24, 1
      %p94 = por %p92, %p93
      %p96 = scmp.ne.s32.totalorder %s81, %s95
      %p97 = scmp.eq.s32.totalorder %s24, 0
      %p98 = por %p96, %p97
      %s100 = sadd.s32 %s99, 1
      %p103 = scmp.eq.s32.totalorder %s18, 1
      %p104 = scmp.ne.s32.totalorder %s99, %s101
      %p105 = scmp.eq.s32.totalorder %s18, 0
      %p106 = por %p104, %p105
      %p107 = scmp.ne.s32.totalorder %s99, %s101
      %p108 = scmp.eq.s32.totalorder %s23, 1
      %p109 = por %p107, %p108
      %p110 = scmp.ne.s32.totalorder %s101, %s102
      %p111 = scmp.eq.s32.totalorder %s23, 0
      %p112 = por %p110, %p111
      %p113 = scmp.ne.s32.totalorder %s101, %s102
      %p114 = scmp.eq.s32.totalorder %s24, 1
      %p115 = por %p113, %p114
      %p117 = scmp.ne.s32.totalorder %s102, %s116
      %p118 = scmp.eq.s32.totalorder %s24, 0
      %p119 = por %p117, %p118
      %s121 = sadd.s32 %s120, 1
      %p124 = scmp.eq.s32.totalorder %s18, 1
      %p125 = scmp.ne.s32.totalorder %s120, %s122
      %p126 = scmp.eq.s32.totalorder %s18, 0
      %p127 = por %p125, %p126
      %p128 = scmp.ne.s32.totalorder %s120, %s122
      %p129 = scmp.eq.s32.totalorder %s23, 1
      %p130 = por %p128, %p129
      %p131 = scmp.ne.s32.totalorder %s122, %s123
      %p132 = scmp.eq.s32.totalorder %s23, 0
      %p133 = por %p131, %p132
      %p134 = scmp.ne.s32.totalorder %s122, %s123
      %p135 = scmp.eq.s32.totalorder %s24, 1
      %p136 = por %p134, %p135
      %p138 = scmp.ne.s32.totalorder %s123, %s137
      %p139 = scmp.eq.s32.totalorder %s24, 0
      %p140 = por %p138, %p139
      %s142 = sadd.s32 %s141, 1
      %p145 = scmp.eq.s32.totalorder %s18, 1
      %p146 = scmp.ne.s32.totalorder %s141, %s143
      %p147 = scmp.eq.s32.totalorder %s18, 0
      %p148 = por %p146, %p147
      %p149 = scmp.ne.s32.totalorder %s141, %s143
      %p150 = scmp.eq.s32.totalorder %s23, 1
      %p151 = por %p149, %p150
      %p152 = scmp.ne.s32.totalorder %s143, %s144
      %p153 = scmp.eq.s32.totalorder %s23, 0
      %p154 = por %p152, %p153
      %p155 = scmp.ne.s32.totalorder %s143, %s144
      %p156 = scmp.eq.s32.totalorder %s24, 1
      %p157 = por %p155, %p156
      %p159 = scmp.ne.s32.totalorder %s144, %s158
      %p160 = scmp.eq.s32.totalorder %s24, 0
      %p161 = por %p159, %p160
      %s163 = sadd.s32 %s162, 1
      %p166 = scmp.eq.s32.totalorder %s18, 1
      %p167 = scmp.ne.s32.totalorder %s162, %s164
      %p168 = scmp.eq.s32.totalorder %s18, 0
      %p169 = por %p167, %p168
      %p170 = scmp.ne.s32.totalorder %s162, %s164
      %p171 = scmp.eq.s32.totalorder %s23, 1
      %p172 = por %p170, %p171
      %p173 = scmp.ne.s32.totalorder %s164, %s165
      %p174 = scmp.eq.s32.totalorder %s23, 0
      %p175 = por %p173, %p174
      %p176 = scmp.ne.s32.totalorder %s164, %s165
      %p177 = scmp.eq.s32.totalorder %s24, 1
      %p178 = por %p176, %p177
      %p180 = scmp.ne.s32.totalorder %s165, %s179
      %p181 = scmp.eq.s32.totalorder %s24, 0
      %p182 = por %p180, %p181
      %s184 = sadd.s32 %s183, 1
      %p187 = scmp.eq.s32.totalorder %s18, 1
      %p188 = scmp.ne.s32.totalorder %s183, %s185
      %p189 = scmp.eq.s32.totalorder %s18, 0
      %p190 = por %p188, %p189
      %p191 = scmp.ne.s32.totalorder %s183, %s185
      %p192 = scmp.eq.s32.totalorder %s23, 1
      %p193 = por %p191, %p192
      %p194 = scmp.ne.s32.totalorder %s185, %s186
      %p195 = scmp.eq.s32.totalorder %s23, 0
      %p196 = por %p194, %p195
      %p197 = scmp.ne.s32.totalorder %s185, %s186
      %p198 = scmp.eq.s32.totalorder %s24, 1
      %p199 = por %p197, %p198
      %p201 = scmp.ne.s32.totalorder %s186, %s200
      %p202 = scmp.eq.s32.totalorder %s24, 0
      %p203 = por %p201, %p202
      %s205 = sadd.s32 %s204, 1
      %p208 = scmp.eq.s32.totalorder %s18, 1
      %p209 = scmp.ne.s32.totalorder %s204, %s206
      %p210 = scmp.eq.s32.totalorder %s18, 0
      %p211 = por %p209, %p210
      %p212 = scmp.ne.s32.totalorder %s204, %s206
      %p213 = scmp.eq.s32.totalorder %s23, 1
      %p214 = por %p212, %p213
      %p215 = scmp.ne.s32.totalorder %s206, %s207
      %p216 = scmp.eq.s32.totalorder %s23, 0
      %p217 = por %p215, %p216
      %p218 = scmp.ne.s32.totalorder %s206, %s207
      %p219 = scmp.eq.s32.totalorder %s24, 1
      %p220 = por %p218, %p219
      %p222 = scmp.ne.s32.totalorder %s207, %s221
      %p223 = scmp.eq.s32.totalorder %s24, 0
      %p224 = por %p222, %p223
      %s226 = sadd.s32 %s225, 1
      %p229 = scmp.eq.s32.totalorder %s18, 1
      %p230 = scmp.ne.s32.totalorder %s225, %s227
      %p231 = scmp.eq.s32.totalorder %s18, 0
      %p232 = por %p230, %p231
      %p233 = scmp.ne.s32.totalorder %s225, %s227
      %p234 = scmp.eq.s32.totalorder %s23, 1
      %p235 = por %p233, %p234
      %p236 = scmp.ne.s32.totalorder %s227, %s228
      %p237 = scmp.eq.s32.totalorder %s23, 0
      %p238 = por %p236, %p237
      %p239 = scmp.ne.s32.totalorder %s227, %s228
      %p240 = scmp.eq.s32.totalorder %s24, 1
      %p241 = por %p239, %p240
      %p243 = scmp.ne.s32.totalorder %s228, %s242
      %p244 = scmp.eq.s32.totalorder %s24, 0
      %p245 = por %p243, %p244
      %s246 = ssub.s32 %s18, %s25
      %p247 = scmp.eq.s32.totalorder %s246, 0
      %s249 = sadd.s32 %s248, 1
      %s250 = scalar_select %p247, %s248, %s249
      %p253 = pneg %p247
      %p254 = scmp.eq.s32.totalorder %s18, 1
      %p255 = por %p253, %p254
      %p256 = scmp.ne.s32.totalorder %s248, %s251
      %p257 = scmp.eq.s32.totalorder %s18, 0
      %p258 = por %p256, %p257
      %p259 = scmp.ne.s32.totalorder %s248, %s251
      %p260 = scmp.eq.s32.totalorder %s23, 1
      %p261 = por %p259, %p260
      %p262 = scmp.ne.s32.totalorder %s251, %s252
      %p263 = scmp.eq.s32.totalorder %s23, 0
      %p264 = por %p262, %p263
      %p265 = scmp.ne.s32.totalorder %s251, %s252
      %p266 = scmp.eq.s32.totalorder %s24, 1
      %p267 = por %p265, %p266
      %p269 = scmp.ne.s32.totalorder %s252, %s268
      %p270 = scmp.eq.s32.totalorder %s24, 0
      %p271 = por %p269, %p270
      %p272 = scmp.le.s32.totalorder 1, %s18
      %p273 = scmp.lt.s32.totalorder %s18, 3
      %p274 = pnand %p272, %p273
      %p275 = pneg %p274
      // Predicated region
      $region9: #{featurenet_forward.1} parent=5 // pred_check
        _
      $region10: #{featurenet_forward.1} parent=5 // pred_check_branch
        %277 = sbr.rel (%p274) target = $region12
      $region11: #{featurenet_forward.1} parent=5 // pred_region
        %s278 = ssub.s32 %s18, 1
        // Predicated region
        $region13: #{featurenet_forward.1} parent=11 // pred_check
          %p279 = pneg %p91
        $region14: #{featurenet_forward.1} parent=11 // pred_check_branch
          %281 = sbr.rel (%p279) target = $region16
        $region15: #{featurenet_forward.1} parent=11 // pred_region
          _
        $region16: #{featurenet_forward.1} parent=11 // pred_fallthru
          _
        // Predicated region
        $region17: #{featurenet_forward.1} parent=11 // pred_check
          %p282 = pneg %p112
        $region18: #{featurenet_forward.1} parent=11 // pred_check_branch
          %284 = sbr.rel (%p282) target = $region20
        $region19: #{featurenet_forward.1} parent=11 // pred_region
          _
        $region20: #{featurenet_forward.1} parent=11 // pred_fallthru
          _
        // Predicated region
        $region21: #{featurenet_forward.1} parent=11 // pred_check
          %p285 = pneg %p133
        $region22: #{featurenet_forward.1} parent=11 // pred_check_branch
          %287 = sbr.rel (%p285) target = $region24
        $region23: #{featurenet_forward.1} parent=11 // pred_region
          _
        $region24: #{featurenet_forward.1} parent=11 // pred_fallthru
          _
        // Predicated region
        $region25: #{featurenet_forward.1} parent=11 // pred_check
          %p288 = pneg %p154
        $region26: #{featurenet_forward.1} parent=11 // pred_check_branch
          %290 = sbr.rel (%p288) target = $region28
        $region27: #{featurenet_forward.1} parent=11 // pred_region
          _
        $region28: #{featurenet_forward.1} parent=11 // pred_fallthru
          _
        // Predicated region
        $region29: #{featurenet_forward.1} parent=11 // pred_check
          %p291 = pneg %p175
        $region30: #{featurenet_forward.1} parent=11 // pred_check_branch
          %293 = sbr.rel (%p291) target = $region32
        $region31: #{featurenet_forward.1} parent=11 // pred_region
          %295 = vsyncadd [#allocation3], 0
          %s296 = sshll.u32 %s6, 4
          %s297 = int_to_ptr.hbm [resolvable:$true] %s296
          %s298 = sshll.u32 [#allocation2], 4
          %s299 = int_to_ptr.vmem [resolvable:$true] %s298
          %304 = dma.hbm_to_vmem [thread:$0]  %s297, 1024, %s299, [#allocation3], 64, 64, 4
        $region32: #{featurenet_forward.1} parent=11 // pred_fallthru
          _
        // Predicated region
        $region33: #{featurenet_forward.1} parent=11 // pred_check
          %p305 = pneg %p196
        $region34: #{featurenet_forward.1} parent=11 // pred_check_branch
          %307 = sbr.rel (%p305) target = $region36
        $region35: #{featurenet_forward.1} parent=11 // pred_region
          %309 = vsyncadd [#allocation5], 0
          %s310 = sshll.u32 %s7, 4
          %s311 = int_to_ptr.hbm [resolvable:$true] %s310
          %s312 = sshll.u32 [#allocation4], 4
          %s313 = int_to_ptr.vmem [resolvable:$true] %s312
          %318 = dma.hbm_to_vmem [thread:$0]  %s311, 1024, %s313, [#allocation5], 64, 64, 4
        $region36: #{featurenet_forward.1} parent=11 // pred_fallthru
          _
        // Predicated region
        $region37: #{featurenet_forward.1} parent=11 // pred_check
          %p319 = pneg %p217
        $region38: #{featurenet_forward.1} parent=11 // pred_check_branch
          %321 = sbr.rel (%p319) target = $region40
        $region39: #{featurenet_forward.1} parent=11 // pred_region
          %323 = vsyncadd [#allocation5], 0
          %s324 = sshll.u32 %s8, 4
          %s325 = int_to_ptr.hbm [resolvable:$true] %s324
          %s326 = sshll.u32 [#allocation6], 4
          %s327 = int_to_ptr.vmem [resolvable:$true] %s326
          %332 = dma.hbm_to_vmem [thread:$0]  %s325, 1024, %s327, [#allocation5], 64, 64, 4
        $region40: #{featurenet_forward.1} parent=11 // pred_fallthru
          _
        // Predicated region
        $region41: #{featurenet_forward.1} parent=11 // pred_check
          %p333 = pneg %p238
        $region42: #{featurenet_forward.1} parent=11 // pred_check_branch
          %335 = sbr.rel (%p333) target = $region44
        $region43: #{featurenet_forward.1} parent=11 // pred_region
          _
        $region44: #{featurenet_forward.1} parent=11 // pred_fallthru
          _
      $region12: #{featurenet_forward.1} parent=5 // pred_fallthru
        _
      %p336 = scmp.lt.s32.totalorder %s18, 2
      // Predicated region
      $region45: #{featurenet_forward.1} parent=5 // pred_check
        %p337 = pneg %p336
      $region46: #{featurenet_forward.1} parent=5 // pred_check_branch
        %339 = sbr.rel (%p337) target = $region48
      $region47: #{featurenet_forward.1} parent=5 // pred_region
        // Predicated region
        $region49: #{featurenet_forward.1} parent=47 // pred_check
          %p340 = pneg %p38
        $region50: #{featurenet_forward.1} parent=47 // pred_check_branch
          %342 = sbr.rel (%p340) target = $region52
        $region51: #{featurenet_forward.1} parent=47 // pred_region
          %s343 = smul.u32 2, %s18
          %s344 = ssub.s32 3, %s343
          %p345 = scmp.lt.s32.totalorder %s344, 2
          %s346 = scalar_select %p345, %s344, 2
          %s347 = smul.u32 8, %s346
          %p348 = scmp.lt.s32.totalorder %s343, 2
          %s349 = scalar_select %p348, %s343, 2
          %s350 = smul.addr %s349, 8
          %s351 = scalar_lea.vmem %s0, %s350
          %s352 = smul.u32 2, %s18
          %s353 = ssub.s32 3, %s352
          %p354 = scmp.lt.s32.totalorder %s353, 2
          %s355 = scalar_select %p354, %s353, 2
          %s356 = smul.u32 8, %s355
        $region52: #{featurenet_forward.1} parent=47 // pred_fallthru
          _
        // Predicated region
        $region53: #{featurenet_forward.1} parent=47 // pred_check
          %p357 = pneg %p64
        $region54: #{featurenet_forward.1} parent=47 // pred_check_branch
          %359 = sbr.rel (%p357) target = $region56
        $region55: #{featurenet_forward.1} parent=47 // pred_region
          %s360 = smul.u32 2, %s18
          %s361 = ssub.s32 3, %s360
          %p362 = scmp.lt.s32.totalorder %s361, 2
          %s363 = scalar_select %p362, %s361, 2
          %s364 = smul.u32 8, %s363
          %p365 = scmp.lt.s32.totalorder %s360, 2
          %s366 = scalar_select %p365, %s360, 2
          %s367 = smul.addr %s366, 8
          %s368 = scalar_lea.vmem %s1, %s367
          %s369 = smul.u32 2, %s18
          %s370 = ssub.s32 3, %s369
          %p371 = scmp.lt.s32.totalorder %s370, 2
          %s372 = scalar_select %p371, %s370, 2
          %s373 = smul.u32 8, %s372
        $region56: #{featurenet_forward.1} parent=47 // pred_fallthru
          _
      $region48: #{featurenet_forward.1} parent=5 // pred_fallthru
        _
      %p374 = scmp.le.s32.totalorder 1, %s18
      %p375 = scmp.lt.s32.totalorder %s18, 3
      %p376 = pnand %p374, %p375
      %p377 = pneg %p376
      // Predicated region
      $region57: #{featurenet_forward.1} parent=5 // pred_check
        _
      $region58: #{featurenet_forward.1} parent=5 // pred_check_branch
        %379 = sbr.rel (%p376) target = $region60
      $region59: #{featurenet_forward.1} parent=5 // pred_region
        %s380 = ssub.s32 %s18, 1
        // Predicated region
        $region61: #{featurenet_forward.1} parent=59 // pred_check
          %p381 = pneg %p175
        $region62: #{featurenet_forward.1} parent=59 // pred_check_branch
          %383 = sbr.rel (%p381) target = $region64
        $region63: #{featurenet_forward.1} parent=59 // pred_region
          %385 = dma.done [#allocation3], 1024
        $region64: #{featurenet_forward.1} parent=59 // pred_fallthru
          _
        // Predicated region
        $region65: #{featurenet_forward.1} parent=59 // pred_check
          %p386 = pneg %p196
        $region66: #{featurenet_forward.1} parent=59 // pred_check_branch
          %388 = sbr.rel (%p386) target = $region68
        $region67: #{featurenet_forward.1} parent=59 // pred_region
          %390 = dma.done [#allocation5], 1024
        $region68: #{featurenet_forward.1} parent=59 // pred_fallthru
          _
        // Predicated region
        $region69: #{featurenet_forward.1} parent=59 // pred_check
          %p391 = pneg %p217
        $region70: #{featurenet_forward.1} parent=59 // pred_check_branch
          %393 = sbr.rel (%p391) target = $region72
        $region71: #{featurenet_forward.1} parent=59 // pred_region
          %395 = dma.done [#allocation5], 1024
        $region72: #{featurenet_forward.1} parent=59 // pred_fallthru
          _
        %s396 = smul.u32 2, %s23
        %s397 = ssub.s32 3, %s396
        %p398 = scmp.lt.s32.totalorder %s397, 2
        %s399 = scalar_select %p398, %s397, 2
        %s400 = smul.u32 8, %s399
        %p401 = scmp.lt.s32.totalorder %s396, 2
        %s402 = scalar_select %p401, %s396, 2
        %s403 = smul.addr %s402, 8
        %s404 = scalar_lea.vmem %s0, %s403
        %p405 = pneg %p44
        %p406 = pneg %p41
        %s407 = smul.u32 2, %s23
        %s408 = ssub.s32 3, %s407
        %p409 = scmp.lt.s32.totalorder %s408, 2
        %s410 = scalar_select %p409, %s408, 2
        %s411 = smul.u32 8, %s410
        %p412 = scmp.lt.s32.totalorder %s407, 2
        %s413 = scalar_select %p412, %s407, 2
        %s414 = smul.addr %s413, 8
        %s415 = scalar_lea.vmem %s1, %s414
        %p416 = pneg %p70
        %p417 = pneg %p67
        %p418 = pneg %p91
        %p419 = pneg %p88
        %p420 = pneg %p112
        %p421 = pneg %p109
        %p422 = pneg %p133
        %p423 = pneg %p130
        %p424 = pneg %p154
        %p425 = pneg %p151
        %p426 = pneg %p175
        %p427 = pneg %p172
        %p428 = pneg %p196
        %p429 = pneg %p193
        %p430 = pneg %p217
        %p431 = pneg %p214
        %p432 = pneg %p238
        %p433 = pneg %p235
        %p434 = pneg %p264
        %p435 = pneg %p261
        %s436 = sand.u32 %s251, 1
        %s437 = sand.u32 %s251, 1
        %s438 = smul.addr %s437, 16
        %s439 = scalar_lea.vmem [#allocation7], %s438
        %s440 = smul.u32 2, %s23
        %s441 = ssub.s32 3, %s440
        %p442 = scmp.lt.s32.totalorder %s441, 2
        %s443 = scalar_select %p442, %s441, 2
        %s444 = smul.u32 8, %s443
        %p445 = scmp.lt.s32.totalorder %s440, 2
        %s446 = scalar_select %p445, %s440, 2
        %s447 = smul.addr %s446, 8
        %s448 = scalar_lea.vmem %s0, %s447
        %s449 = smul.u32 2, %s23
        %s450 = ssub.s32 3, %s449
        %p451 = scmp.lt.s32.totalorder %s450, 2
        %s452 = scalar_select %p451, %s450, 2
        %s453 = smul.u32 8, %s452
        %s454 = smul.u32 2, %s23
        %s455 = ssub.s32 3, %s454
        %p456 = scmp.lt.s32.totalorder %s455, 2
        %s457 = scalar_select %p456, %s455, 2
        %s458 = smul.u32 8, %s457
        %p459 = scmp.lt.s32.totalorder %s454, 2
        %s460 = scalar_select %p459, %s454, 2
        %s461 = smul.addr %s460, 8
        %s462 = scalar_lea.vmem %s1, %s461
        %s463 = smul.u32 2, %s23
        %s464 = ssub.s32 3, %s463
        %p465 = scmp.lt.s32.totalorder %s464, 2
        %s466 = scalar_select %p465, %s464, 2
        %s467 = smul.u32 8, %s466
        %s468 = smul.u32 2, %s23
        %s469 = ssub.s32 3, %s468
        %p470 = scmp.lt.s32.totalorder %s469, 2
        %s471 = scalar_select %p470, %s469, 2
        %s472 = smul.u32 8, %s471
        %v474 = vld [vmem:[%s448] sm:$0xff]
        %v475 = vld [vmem:[%s448 + $0x8] sm:$0xff]
        %v476 = vpack.c.bf16 %v475, %v474
        %v477 = vld [vmem:[%s462] sm:$0xff]
        %v478 = vld [vmem:[%s462 + $0x8] sm:$0xff]
        %v479 = vpack.c.bf16 %v478, %v477
        %v480 = vld [vmem:[%s9] sm:$0x3f]
        %v481 = vld [vmem:[%s2] sm:$0xf]
        %v482 = vld [vmem:[%s2 + $0x4] sm:$0xf]
        %v483 = vld [vmem:[%s2 + $0x8] sm:$0xf]
        %v484 = vld [vmem:[%s2 + $0xc] sm:$0xf]
        %v485 = vld [vmem:[%s3] sm:$0xf]
        %v486 = vld [vmem:[%s3 + $0x4] sm:$0xf]
        %v489 = vunpack.c.l.b16 %v485
        %v490 = vunpack.c.l.b16 %v486
        %v491 = vpack.c.b16 %v490, %v489
        %vm493 = vcmask 130048
        %v495 = vsel %vm493, %v479, 0
        %497 = vmatpush.bf16.msra.mxu0 0
        %498 = vmatpush.bf16.msra.mxu0 0
        %499 = vmatpush.bf16.msra.mxu0 0
        %500 = vmatpush.bf16.msra.mxu0 0
        %501 = vmatpush.bf16.msra.mxu0 0
        %502 = vmatpush.bf16.msra.mxu0 0
        %503 = vmatpush.bf16.msra.mxu0 0
        %504 = vmatpush.bf16.msra.mxu0 %v491
        %505 = vmatmul.bf16.gmra.mxu0 %v495
        %v506 = vpop.f32.mrf.mxu0
        %v507 = vadd.f32 0.0, %v506
        %v508 = vpop.f32.mrf.mxu0
        %v509 = vadd.f32 0.0, %v508
        %510 = vdwg.mxu0
        %v515 = vunpack.c.l.b16 %v481
        %v516 = vunpack.c.l.b16 %v482
        %v517 = vunpack.c.l.b16 %v483
        %v518 = vunpack.c.l.b16 %v484
        %v519 = vpack.c.b16 %v516, %v515
        %v520 = vpack.c.b16 %v518, %v517
        %vm523 = vcmask 261120
        %v525 = vsel %vm523, %v476, 0
        %527 = vmatpush.bf16.msra.mxu0 0
        %528 = vmatpush.bf16.msra.mxu0 0
        %529 = vmatpush.bf16.msra.mxu0 0
        %530 = vmatpush.bf16.msra.mxu0 0
        %531 = vmatpush.bf16.msra.mxu0 0
        %532 = vmatpush.bf16.msra.mxu0 0
        %533 = vmatpush.bf16.msra.mxu0 %v520
        %534 = vmatpush.bf16.msra.mxu0 %v519
        %535 = vmatmul.bf16.gmra.mxu0 %v525
        %v536 = vpop.f32.mrf.mxu0
        %v537 = vadd.f32 %v507, %v536
        %v538 = vpop.f32.mrf.mxu0
        %v539 = vadd.f32 %v509, %v538
        %540 = vdwg.mxu0
        %v541 = vperm.slane %v480, 0
        %v542 = vadd.f32 %v537, %v541
        %v543 = vadd.f32 %v539, %v541
        %v544 = vmax.f32 %v542, 0.0
        %v545 = vmax.f32 %v543, 0.0
        %v546 = vpack.c.bf16 %v545, %v544
        %v547 = vld [vmem:[%s4] sm:$0xf]
        %v548 = vld [vmem:[%s4 + $0x4] sm:$0xf]
        %v549 = vld [vmem:[%s4 + $0x8] sm:$0xf]
        %v550 = vld [vmem:[%s4 + $0xc] sm:$0xf]
        %v551 = vld [vmem:[%s4 + $0x10] sm:$0xf]
        %v552 = vld [vmem:[%s4 + $0x14] sm:$0xf]
        %v553 = vld [vmem:[%s4 + $0x18] sm:$0xf]
        %v554 = vld [vmem:[%s4 + $0x1c] sm:$0xf]
        %v555 = vld [vmem:[%s4 + $0x20] sm:$0xf]
        %v556 = vld [vmem:[%s4 + $0x24] sm:$0xf]
        %v557 = vld [vmem:[%s4 + $0x28] sm:$0xf]
        %v558 = vld [vmem:[%s4 + $0x2c] sm:$0xf]
        %v559 = vld [vmem:[%s4 + $0x30] sm:$0xf]
        %v560 = vld [vmem:[%s4 + $0x34] sm:$0xf]
        %v561 = vld [vmem:[%s4 + $0x38] sm:$0xf]
        %v562 = vld [vmem:[%s4 + $0x3c] sm:$0xf]
        %v563 = vperm.slane %v480, 1
        %v580 = vunpack.c.l.b16 %v547
        %v581 = vunpack.c.l.b16 %v548
        %v582 = vunpack.c.l.b16 %v549
        %v583 = vunpack.c.l.b16 %v550
        %v584 = vunpack.c.l.b16 %v551
        %v585 = vunpack.c.l.b16 %v552
        %v586 = vunpack.c.l.b16 %v553
        %v587 = vunpack.c.l.b16 %v554
        %v588 = vunpack.c.l.b16 %v555
        %v589 = vunpack.c.l.b16 %v556
        %v590 = vunpack.c.l.b16 %v557
        %v591 = vunpack.c.l.b16 %v558
        %v592 = vunpack.c.l.b16 %v559
        %v593 = vunpack.c.l.b16 %v560
        %v594 = vunpack.c.l.b16 %v561
        %v595 = vunpack.c.l.b16 %v562
        %v596 = vpack.c.b16 %v581, %v580
        %v597 = vpack.c.b16 %v583, %v582
        %v598 = vpack.c.b16 %v585, %v584
        %v599 = vpack.c.b16 %v587, %v586
        %v600 = vpack.c.b16 %v589, %v588
        %v601 = vpack.c.b16 %v591, %v590
        %v602 = vpack.c.b16 %v593, %v592
        %v603 = vpack.c.b16 %v595, %v594
        %612 = vmatpush.bf16.msra.mxu0 %v603
        %613 = vmatpush.bf16.msra.mxu0 %v602
        %614 = vmatpush.bf16.msra.mxu0 %v601
        %615 = vmatpush.bf16.msra.mxu0 %v600
        %616 = vmatpush.bf16.msra.mxu0 %v599
        %617 = vmatpush.bf16.msra.mxu0 %v598
        %618 = vmatpush.bf16.msra.mxu0 %v597
        %619 = vmatpush.bf16.msra.mxu0 %v596
        %620 = vmatmul.bf16.gmra.mxu0 %v546
        %v621 = vpop.f32.mrf.mxu0
        %v622 = vadd.f32 %v563, %v621
        %v623 = vpop.f32.mrf.mxu0
        %v624 = vadd.f32 %v563, %v623
        %625 = vdwg.mxu0
        %v626 = vmax.f32 %v622, 0.0
        %v627 = vmax.f32 %v624, 0.0
        %v628 = vpack.c.bf16 %v627, %v626
        %v629 = vld [vmem:[%s5] sm:$0xf]
        %v630 = vld [vmem:[%s5 + $0x4] sm:$0xf]
        %v631 = vld [vmem:[%s5 + $0x8] sm:$0xf]
        %v632 = vld [vmem:[%s5 + $0xc] sm:$0xf]
        %v633 = vld [vmem:[%s5 + $0x10] sm:$0xf]
        %v634 = vld [vmem:[%s5 + $0x14] sm:$0xf]
        %v635 = vld [vmem:[%s5 + $0x18] sm:$0xf]
        %v636 = vld [vmem:[%s5 + $0x1c] sm:$0xf]
        %v637 = vld [vmem:[%s5 + $0x20] sm:$0xf]
        %v638 = vld [vmem:[%s5 + $0x24] sm:$0xf]
        %v639 = vld [vmem:[%s5 + $0x28] sm:$0xf]
        %v640 = vld [vmem:[%s5 + $0x2c] sm:$0xf]
        %v641 = vld [vmem:[%s5 + $0x30] sm:$0xf]
        %v642 = vld [vmem:[%s5 + $0x34] sm:$0xf]
        %v643 = vld [vmem:[%s5 + $0x38] sm:$0xf]
        %v644 = vld [vmem:[%s5 + $0x3c] sm:$0xf]
        %v645 = vperm.slane %v480, 2
        %v662 = vunpack.c.l.b16 %v629
        %v663 = vunpack.c.l.b16 %v630
        %v664 = vunpack.c.l.b16 %v631
        %v665 = vunpack.c.l.b16 %v632
        %v666 = vunpack.c.l.b16 %v633
        %v667 = vunpack.c.l.b16 %v634
        %v668 = vunpack.c.l.b16 %v635
        %v669 = vunpack.c.l.b16 %v636
        %v670 = vunpack.c.l.b16 %v637
        %v671 = vunpack.c.l.b16 %v638
        %v672 = vunpack.c.l.b16 %v639
        %v673 = vunpack.c.l.b16 %v640
        %v674 = vunpack.c.l.b16 %v641
        %v675 = vunpack.c.l.b16 %v642
        %v676 = vunpack.c.l.b16 %v643
        %v677 = vunpack.c.l.b16 %v644
        %v678 = vpack.c.b16 %v663, %v662
        %v679 = vpack.c.b16 %v665, %v664
        %v680 = vpack.c.b16 %v667, %v666
        %v681 = vpack.c.b16 %v669, %v668
        %v682 = vpack.c.b16 %v671, %v670
        %v683 = vpack.c.b16 %v673, %v672
        %v684 = vpack.c.b16 %v675, %v674
        %v685 = vpack.c.b16 %v677, %v676
        %694 = vmatpush.bf16.msra.mxu0 %v685
        %695 = vmatpush.bf16.msra.mxu0 %v684
        %696 = vmatpush.bf16.msra.mxu0 %v683
        %697 = vmatpush.bf16.msra.mxu0 %v682
        %698 = vmatpush.bf16.msra.mxu0 %v681
        %699 = vmatpush.bf16.msra.mxu0 %v680
        %700 = vmatpush.bf16.msra.mxu0 %v679
        %701 = vmatpush.bf16.msra.mxu0 %v678
        %702 = vmatmul.bf16.gmra.mxu0 %v628
        %v703 = vpop.f32.mrf.mxu0
        %v704 = vadd.f32 %v645, %v703
        %v705 = vpop.f32.mrf.mxu0
        %v706 = vadd.f32 %v645, %v705
        %707 = vdwg.mxu0
        %v708 = vmax.f32 %v704, 0.0
        %v709 = vmax.f32 %v706, 0.0
        %v710 = vpack.c.bf16 %v709, %v708
        %v711 = vld [vmem:[#allocation2] sm:$0xf]
        %v712 = vld [vmem:[#allocation2 + $0x4] sm:$0xf]
        %v713 = vld [vmem:[#allocation2 + $0x8] sm:$0xf]
        %v714 = vld [vmem:[#allocation2 + $0xc] sm:$0xf]
        %v715 = vld [vmem:[#allocation2 + $0x10] sm:$0xf]
        %v716 = vld [vmem:[#allocation2 + $0x14] sm:$0xf]
        %v717 = vld [vmem:[#allocation2 + $0x18] sm:$0xf]
        %v718 = vld [vmem:[#allocation2 + $0x1c] sm:$0xf]
        %v719 = vld [vmem:[#allocation2 + $0x20] sm:$0xf]
        %v720 = vld [vmem:[#allocation2 + $0x24] sm:$0xf]
        %v721 = vld [vmem:[#allocation2 + $0x28] sm:$0xf]
        %v722 = vld [vmem:[#allocation2 + $0x2c] sm:$0xf]
        %v723 = vld [vmem:[#allocation2 + $0x30] sm:$0xf]
        %v724 = vld [vmem:[#allocation2 + $0x34] sm:$0xf]
        %v725 = vld [vmem:[#allocation2 + $0x38] sm:$0xf]
        %v726 = vld [vmem:[#allocation2 + $0x3c] sm:$0xf]
        %v727 = vperm.slane %v480, 3
        %v744 = vunpack.c.l.b16 %v711
        %v745 = vunpack.c.l.b16 %v712
        %v746 = vunpack.c.l.b16 %v713
        %v747 = vunpack.c.l.b16 %v714
        %v748 = vunpack.c.l.b16 %v715
        %v749 = vunpack.c.l.b16 %v716
        %v750 = vunpack.c.l.b16 %v717
        %v751 = vunpack.c.l.b16 %v718
        %v752 = vunpack.c.l.b16 %v719
        %v753 = vunpack.c.l.b16 %v720
        %v754 = vunpack.c.l.b16 %v721
        %v755 = vunpack.c.l.b16 %v722
        %v756 = vunpack.c.l.b16 %v723
        %v757 = vunpack.c.l.b16 %v724
        %v758 = vunpack.c.l.b16 %v725
        %v759 = vunpack.c.l.b16 %v726
        %v760 = vpack.c.b16 %v745, %v744
        %v761 = vpack.c.b16 %v747, %v746
        %v762 = vpack.c.b16 %v749, %v748
        %v763 = vpack.c.b16 %v751, %v750
        %v764 = vpack.c.b16 %v753, %v752
        %v765 = vpack.c.b16 %v755, %v754
        %v766 = vpack.c.b16 %v757, %v756
        %v767 = vpack.c.b16 %v759, %v758
        %776 = vmatpush.bf16.msra.mxu0 %v767
        %777 = vmatpush.bf16.msra.mxu0 %v766
        %778 = vmatpush.bf16.msra.mxu0 %v765
        %779 = vmatpush.bf16.msra.mxu0 %v764
        %780 = vmatpush.bf16.msra.mxu0 %v763
        %781 = vmatpush.bf16.msra.mxu0 %v762
        %782 = vmatpush.bf16.msra.mxu0 %v761
        %783 = vmatpush.bf16.msra.mxu0 %v760
        %784 = vmatmul.bf16.gmra.mxu0 %v710
        %v785 = vpop.f32.mrf.mxu0
        %v786 = vadd.f32 %v727, %v785
        %v787 = vpop.f32.mrf.mxu0
        %v788 = vadd.f32 %v727, %v787
        %789 = vdwg.mxu0
        %v790 = vmax.f32 %v786, 0.0
        %v791 = vmax.f32 %v788, 0.0
        %v792 = vpack.c.bf16 %v791, %v790
        %v793 = vld [vmem:[#allocation4] sm:$0xf]
        %v794 = vld [vmem:[#allocation4 + $0x4] sm:$0xf]
        %v795 = vld [vmem:[#allocation4 + $0x8] sm:$0xf]
        %v796 = vld [vmem:[#allocation4 + $0xc] sm:$0xf]
        %v797 = vld [vmem:[#allocation4 + $0x10] sm:$0xf]
        %v798 = vld [vmem:[#allocation4 + $0x14] sm:$0xf]
        %v799 = vld [vmem:[#allocation4 + $0x18] sm:$0xf]
        %v800 = vld [vmem:[#allocation4 + $0x1c] sm:$0xf]
        %v801 = vld [vmem:[#allocation4 + $0x20] sm:$0xf]
        %v802 = vld [vmem:[#allocation4 + $0x24] sm:$0xf]
        %v803 = vld [vmem:[#allocation4 + $0x28] sm:$0xf]
        %v804 = vld [vmem:[#allocation4 + $0x2c] sm:$0xf]
        %v805 = vld [vmem:[#allocation4 + $0x30] sm:$0xf]
        %v806 = vld [vmem:[#allocation4 + $0x34] sm:$0xf]
        %v807 = vld [vmem:[#allocation4 + $0x38] sm:$0xf]
        %v808 = vld [vmem:[#allocation4 + $0x3c] sm:$0xf]
        %v809 = vperm.slane %v480, 4
        %v826 = vunpack.c.l.b16 %v793
        %v827 = vunpack.c.l.b16 %v794
        %v828 = vunpack.c.l.b16 %v795
        %v829 = vunpack.c.l.b16 %v796
        %v830 = vunpack.c.l.b16 %v797
        %v831 = vunpack.c.l.b16 %v798
        %v832 = vunpack.c.l.b16 %v799
        %v833 = vunpack.c.l.b16 %v800
        %v834 = vunpack.c.l.b16 %v801
        %v835 = vunpack.c.l.b16 %v802
        %v836 = vunpack.c.l.b16 %v803
        %v837 = vunpack.c.l.b16 %v804
        %v838 = vunpack.c.l.b16 %v805
        %v839 = vunpack.c.l.b16 %v806
        %v840 = vunpack.c.l.b16 %v807
        %v841 = vunpack.c.l.b16 %v808
        %v842 = vpack.c.b16 %v827, %v826
        %v843 = vpack.c.b16 %v829, %v828
        %v844 = vpack.c.b16 %v831, %v830
        %v845 = vpack.c.b16 %v833, %v832
        %v846 = vpack.c.b16 %v835, %v834
        %v847 = vpack.c.b16 %v837, %v836
        %v848 = vpack.c.b16 %v839, %v838
        %v849 = vpack.c.b16 %v841, %v840
        %858 = vmatpush.bf16.msra.mxu0 %v849
        %859 = vmatpush.bf16.msra.mxu0 %v848
        %860 = vmatpush.bf16.msra.mxu0 %v847
        %861 = vmatpush.bf16.msra.mxu0 %v846
        %862 = vmatpush.bf16.msra.mxu0 %v845
        %863 = vmatpush.bf16.msra.mxu0 %v844
        %864 = vmatpush.bf16.msra.mxu0 %v843
        %865 = vmatpush.bf16.msra.mxu0 %v842
        %866 = vmatmul.bf16.gmra.mxu0 %v792
        %v867 = vpop.f32.mrf.mxu0
        %v868 = vadd.f32 %v809, %v867
        %v869 = vpop.f32.mrf.mxu0
        %v870 = vadd.f32 %v809, %v869
        %871 = vdwg.mxu0
        %v872 = vmax.f32 %v868, 0.0
        %v873 = vmax.f32 %v870, 0.0
        %v874 = vpack.c.bf16 %v873, %v872
        %v875 = vld [vmem:[#allocation6] sm:$0xf]
        %v876 = vld [vmem:[#allocation6 + $0x4] sm:$0xf]
        %v877 = vld [vmem:[#allocation6 + $0x8] sm:$0xf]
        %v878 = vld [vmem:[#allocation6 + $0xc] sm:$0xf]
        %v879 = vld [vmem:[#allocation6 + $0x10] sm:$0xf]
        %v880 = vld [vmem:[#allocation6 + $0x14] sm:$0xf]
        %v881 = vld [vmem:[#allocation6 + $0x18] sm:$0xf]
        %v882 = vld [vmem:[#allocation6 + $0x1c] sm:$0xf]
        %v883 = vld [vmem:[#allocation6 + $0x20] sm:$0xf]
        %v884 = vld [vmem:[#allocation6 + $0x24] sm:$0xf]
        %v885 = vld [vmem:[#allocation6 + $0x28] sm:$0xf]
        %v886 = vld [vmem:[#allocation6 + $0x2c] sm:$0xf]
        %v887 = vld [vmem:[#allocation6 + $0x30] sm:$0xf]
        %v888 = vld [vmem:[#allocation6 + $0x34] sm:$0xf]
        %v889 = vld [vmem:[#allocation6 + $0x38] sm:$0xf]
        %v890 = vld [vmem:[#allocation6 + $0x3c] sm:$0xf]
        %v891 = vperm.slane %v480, 5
        %v908 = vunpack.c.l.b16 %v875
        %v909 = vunpack.c.l.b16 %v876
        %v910 = vunpack.c.l.b16 %v877
        %v911 = vunpack.c.l.b16 %v878
        %v912 = vunpack.c.l.b16 %v879
        %v913 = vunpack.c.l.b16 %v880
        %v914 = vunpack.c.l.b16 %v881
        %v915 = vunpack.c.l.b16 %v882
        %v916 = vunpack.c.l.b16 %v883
        %v917 = vunpack.c.l.b16 %v884
        %v918 = vunpack.c.l.b16 %v885
        %v919 = vunpack.c.l.b16 %v886
        %v920 = vunpack.c.l.b16 %v887
        %v921 = vunpack.c.l.b16 %v888
        %v922 = vunpack.c.l.b16 %v889
        %v923 = vunpack.c.l.b16 %v890
        %v924 = vpack.c.b16 %v909, %v908
        %v925 = vpack.c.b16 %v911, %v910
        %v926 = vpack.c.b16 %v913, %v912
        %v927 = vpack.c.b16 %v915, %v914
        %v928 = vpack.c.b16 %v917, %v916
        %v929 = vpack.c.b16 %v919, %v918
        %v930 = vpack.c.b16 %v921, %v920
        %v931 = vpack.c.b16 %v923, %v922
        %940 = vmatpush.bf16.msra.mxu0 %v931
        %941 = vmatpush.bf16.msra.mxu0 %v930
        %942 = vmatpush.bf16.msra.mxu0 %v929
        %943 = vmatpush.bf16.msra.mxu0 %v928
        %944 = vmatpush.bf16.msra.mxu0 %v927
        %945 = vmatpush.bf16.msra.mxu0 %v926
        %946 = vmatpush.bf16.msra.mxu0 %v925
        %947 = vmatpush.bf16.msra.mxu0 %v924
        %948 = vmatmul.bf16.gmra.mxu0 %v874
        %v949 = vpop.f32.mrf.mxu0
        %v950 = vadd.f32 %v891, %v949
        %v951 = vpop.f32.mrf.mxu0
        %v952 = vadd.f32 %v891, %v951
        %953 = vdwg.mxu0
        %954 = vst [vmem:[%s439] sm:$0xff] %v950
        %955 = vst [vmem:[%s439 + $0x8] sm:$0xff] %v952
        %s956 = sand.u32 %s251, 1
        %s957 = sand.u32 %s251, 1
        %s958 = smul.addr %s957, 16
        %s959 = scalar_lea.vmem [#allocation7], %s958
        // Predicated region
        $region73: #{featurenet_forward.1} parent=59 // pred_check
          %p960 = pneg %p261
        $region74: #{featurenet_forward.1} parent=59 // pred_check_branch
          %962 = sbr.rel (%p960) target = $region76
        $region75: #{featurenet_forward.1} parent=59 // pred_region
          %s963 = smul.u32 2, %s23
          %s964 = ssub.s32 3, %s963
          %p965 = scmp.lt.s32.totalorder %s964, 2
          %s966 = scalar_select %p965, %s964, 2
          %s967 = smul.u32 8, %s966
          %p968 = scmp.ne.s32.totalorder 0, %s967
          %s969 = smul.addr %s963, 8
          %s970 = scalar_lea.vmem %s10, %s969
          // Predicated region
          $region77: #{featurenet_forward.1} parent=75 // pred_check
            %p971 = pneg %p968
          $region78: #{featurenet_forward.1} parent=75 // pred_check_branch
            %973 = sbr.rel (%p971) target = $region80
          $region79: #{featurenet_forward.1} parent=75 // pred_region
            // Predicated region
            $region81: #{featurenet_forward.1} parent=79 // pred_check
              _
            $region82: #{featurenet_forward.1} parent=79 // pred_check_branch
              %975 = sbr.rel (0) target = $region84
            $region83: #{featurenet_forward.1} parent=79 // pred_region
              // Predicated region
              $region103: #{featurenet_forward.1} parent=83 // pred_check
                _
              $region104: #{featurenet_forward.1} parent=83 // pred_check_branch
                %1027 = sbr.rel (0) target = $region106
              $region105: #{featurenet_forward.1} parent=83 // pred_region
                %s1028 = sshrl.u32 %s966, 1
                // While loop
                $region107: #{featurenet_forward.1} parent=105 // loop_pre_header
                  _
                $region108: #{featurenet_forward.1} parent=105 // loop_header
                  %s1030 = sphi 0, %s1032
                  %p1031 = scmp.ge.s32.totalorder %s1030, %s1028
                  %s1035 = sphi 0, %s1044
                  %s1036 = sphi %s959, %s1047
                  %s1037 = sphi %s970, %s1048
                $region109: #{featurenet_forward.1} parent=105 // loop_header_branch
                  %1034 = sbr.rel (%p1031) target = $region113
                $region110: #{featurenet_forward.1} parent=105 // loop_body
                  %v1038 = vld [vmem:[%s1036] sm:$0xff]
                  %1039 = vst [vmem:[%s1037] sm:$0xff] %v1038
                  %v1040 = vld [vmem:[%s1036 + $0x8] sm:$0xff]
                  %1041 = vst [vmem:[%s1037 + $0x8] sm:$0xff] %v1040
                  %s1042 = sadd.s32 1, %s1035
                  %p1043 = scmp.ge.s32.totalorder %s1042, %s1028
                  %s1044 = scalar_select %p1043, 0, %s1042
                  %s1045 = smul.u32 %s1044, 16
                  %s1046 = smul.u32 %s1044, 16
                  %s1047 = scalar_lea.vmem %s959, %s1045 [#allocation7]
                  %s1048 = scalar_lea.vmem %s970, %s1046
                $region111: #{featurenet_forward.1} parent=105 // loop_footer
                  %s1032 = sadd.s32 %s1030, 1
                $region112: #{featurenet_forward.1} parent=105 // loop_footer_branch
                  %1029 = sbr.rel target = $region108
                $region113: #{featurenet_forward.1} parent=105 // loop_exit
                  _
                %s1049 = sshrl.u32 %s966, 1
                %s1050 = sand.u32 %s966, 1
                %s1051 = smul.u32 %s1049, 2
                %s1052 = smul.u32 8, %s1051
                %s1053 = scalar_lea.vmem %s959, %s1052 [#allocation7]
                %s1054 = smul.u32 8, %s1051
                %s1055 = scalar_lea.vmem %s970, %s1054
                // While loop
                $region114: #{featurenet_forward.1} parent=105 // loop_pre_header
                  _
                $region115: #{featurenet_forward.1} parent=105 // loop_header
                  %s1057 = sphi 0, %s1059
                  %p1058 = scmp.ge.s32.totalorder %s1057, %s1050
                  %s1062 = sphi 0, %s1069
                  %s1063 = sphi %s1053, %s1072
                  %s1064 = sphi %s1055, %s1073
                $region116: #{featurenet_forward.1} parent=105 // loop_header_branch
                  %1061 = sbr.rel (%p1058) target = $region120
                $region117: #{featurenet_forward.1} parent=105 // loop_body
                  %v1065 = vld [vmem:[%s1063] sm:$0xff]
                  %1066 = vst [vmem:[%s1064] sm:$0xff] %v1065
                  %s1067 = sadd.s32 1, %s1062
                  %p1068 = scmp.ge.s32.totalorder %s1067, %s1050
                  %s1069 = scalar_select %p1068, 0, %s1067
                  %s1070 = smul.u32 %s1069, 8
                  %s1071 = smul.u32 %s1069, 8
                  %s1072 = scalar_lea.vmem %s1053, %s1070 [#allocation7]
                  %s1073 = scalar_lea.vmem %s1055, %s1071
                $region118: #{featurenet_forward.1} parent=105 // loop_footer
                  %s1059 = sadd.s32 %s1057, 1
                $region119: #{featurenet_forward.1} parent=105 // loop_footer_branch
                  %1056 = sbr.rel target = $region115
                $region120: #{featurenet_forward.1} parent=105 // loop_exit
                  _
              $region106: #{featurenet_forward.1} parent=83 // pred_fallthru
                _
              // Predicated region
              $region121: #{featurenet_forward.1} parent=83 // pred_check
                _
              $region122: #{featurenet_forward.1} parent=83 // pred_check_branch
                %1075 = sbr.rel target = $region124
              $region123: #{featurenet_forward.1} parent=83 // pred_region
                _
              $region124: #{featurenet_forward.1} parent=83 // pred_fallthru
                _
            $region84: #{featurenet_forward.1} parent=79 // pred_fallthru
              _
            // Predicated region
            $region85: #{featurenet_forward.1} parent=79 // pred_check
              _
            $region86: #{featurenet_forward.1} parent=79 // pred_check_branch
              %977 = sbr.rel target = $region88
            $region87: #{featurenet_forward.1} parent=79 // pred_region
              %s979 = ssub.s32 256, 1
              %s980 = sshrl.u32 %s966, 1
              // While loop
              $region89: #{featurenet_forward.1} parent=87 // loop_pre_header
                _
              $region90: #{featurenet_forward.1} parent=87 // loop_header
                %s982 = sphi 0, %s984
                %p983 = scmp.ge.s32.totalorder %s982, %s980
                %s987 = sphi 0, %s996
                %s988 = sphi %s959, %s999
                %s989 = sphi %s970, %s1000
              $region91: #{featurenet_forward.1} parent=87 // loop_header_branch
                %986 = sbr.rel (%p983) target = $region95
              $region92: #{featurenet_forward.1} parent=87 // loop_body
                %v990 = vld [vmem:[%s988] sm:%s979]
                %991 = vst [vmem:[%s989] sm:%s979] %v990
                %v992 = vld [vmem:[%s988 + $0x8] sm:%s979]
                %993 = vst [vmem:[%s989 + $0x8] sm:%s979] %v992
                %s994 = sadd.s32 1, %s987
                %p995 = scmp.ge.s32.totalorder %s994, %s980
                %s996 = scalar_select %p995, 0, %s994
                %s997 = smul.u32 %s996, 16
                %s998 = smul.u32 %s996, 16
                %s999 = scalar_lea.vmem %s959, %s997 [#allocation7]
                %s1000 = scalar_lea.vmem %s970, %s998
              $region93: #{featurenet_forward.1} parent=87 // loop_footer
                %s984 = sadd.s32 %s982, 1
              $region94: #{featurenet_forward.1} parent=87 // loop_footer_branch
                %981 = sbr.rel target = $region90
              $region95: #{featurenet_forward.1} parent=87 // loop_exit
                _
              %s1001 = sshrl.u32 %s966, 1
              %s1002 = sand.u32 %s966, 1
              %s1003 = smul.u32 %s1001, 2
              %s1004 = smul.u32 8, %s1003
              %s1005 = scalar_lea.vmem %s959, %s1004 [#allocation7]
              %s1006 = smul.u32 8, %s1003
              %s1007 = scalar_lea.vmem %s970, %s1006
              // While loop
              $region96: #{featurenet_forward.1} parent=87 // loop_pre_header
                _
              $region97: #{featurenet_forward.1} parent=87 // loop_header
                %s1009 = sphi 0, %s1011
                %p1010 = scmp.ge.s32.totalorder %s1009, %s1002
                %s1014 = sphi 0, %s1021
                %s1015 = sphi %s1005, %s1024
                %s1016 = sphi %s1007, %s1025
              $region98: #{featurenet_forward.1} parent=87 // loop_header_branch
                %1013 = sbr.rel (%p1010) target = $region102
              $region99: #{featurenet_forward.1} parent=87 // loop_body
                %v1017 = vld [vmem:[%s1015] sm:%s979]
                %1018 = vst [vmem:[%s1016] sm:%s979] %v1017
                %s1019 = sadd.s32 1, %s1014
                %p1020 = scmp.ge.s32.totalorder %s1019, %s1002
                %s1021 = scalar_select %p1020, 0, %s1019
                %s1022 = smul.u32 %s1021, 8
                %s1023 = smul.u32 %s1021, 8
                %s1024 = scalar_lea.vmem %s1005, %s1022 [#allocation7]
                %s1025 = scalar_lea.vmem %s1007, %s1023
              $region100: #{featurenet_forward.1} parent=87 // loop_footer
                %s1011 = sadd.s32 %s1009, 1
              $region101: #{featurenet_forward.1} parent=87 // loop_footer_branch
                %1008 = sbr.rel target = $region97
              $region102: #{featurenet_forward.1} parent=87 // loop_exit
                _
            $region88: #{featurenet_forward.1} parent=79 // pred_fallthru
              _
          $region80: #{featurenet_forward.1} parent=75 // pred_fallthru
            _
          %1076 = vnop
        $region76: #{featurenet_forward.1} parent=59 // pred_fallthru
          _
      $region60: #{featurenet_forward.1} parent=5 // pred_fallthru
        _
      %p1077 = scmp.le.s32.totalorder 2, %s18
      // Predicated region
      $region125: #{featurenet_forward.1} parent=5 // pred_check
        %p1078 = pneg %p1077
      $region126: #{featurenet_forward.1} parent=5 // pred_check_branch
        %1080 = sbr.rel (%p1078) target = $region128
      $region127: #{featurenet_forward.1} parent=5 // pred_region
        %s1081 = ssub.s32 %s18, 2
        // Predicated region
        $region129: #{featurenet_forward.1} parent=127 // pred_check
          %p1082 = pneg %p267
        $region130: #{featurenet_forward.1} parent=127 // pred_check_branch
          %1084 = sbr.rel (%p1082) target = $region132
        $region131: #{featurenet_forward.1} parent=127 // pred_region
          %s1085 = sand.u32 %s252, 1
          %s1086 = sand.u32 %s252, 1
          %s1087 = smul.addr %s1086, 16
          %s1088 = scalar_lea.vmem [#allocation7], %s1087
        $region132: #{featurenet_forward.1} parent=127 // pred_fallthru
          _
      $region128: #{featurenet_forward.1} parent=5 // pred_fallthru
        _
    $region6: #{featurenet_forward.1} parent=1 // loop_footer
      %s22 = sadd.s32 1, %s18
    $region7: #{featurenet_forward.1} parent=1 // loop_footer_branch
      %17 = sbr.rel target = $region3
    $region8: #{featurenet_forward.1} parent=1 // loop_exit
      _
    %1089 = vsyncpa [#allocation3], 1
    %s1090 = scalar_lea.sflag [#allocation3], 1
    %1091 = vsyncpa %s1090, 1
    %1092 = vsyncpa [#allocation5], 1

</llo_original>
